<compile_context>
chip_gen: v5e
topology: v5e:2x2
jax: 0.10.0
libtpu: 0.0.40
codegen_flags: <defaults>
</compile_context>

<pallas_src>
import math
from functools import partial

import jax
import jax.numpy as jnp
from jax.experimental import pallas as pl
from jax.experimental.pallas import tpu as pltpu


def _triplet_attn_kernel(x_ref, wqkv_ref, wout_ref, o_ref, *, batch):
    """Block-diagonal fused self-attention + fused output projection.

    x_ref    : (R, E)            flattened combined input, R = L*B; row r -> (l = r // B, b = r % B)
    wqkv_ref : (E+1, 3E)         rows 0..E-1 = fused, pre-transposed, pre-scaled in_proj weight
                                 (y = x @ W, q-scale folded in); row E = bias
    wout_ref : (E+1, embed_dim)  rows 0..E-1 = fused (mha_out_proj o out_proj) weight; row E = bias
    o_ref    : (R, embed_dim)    final projected output (dropout is eval-mode identity)
    """
    R, E = x_ref.shape

    # --- fused QKV projection: one MXU weight load over the whole combined batch ------------
    x = x_ref[...]
    w_qkv = wqkv_ref[:E, :]
    b_qkv = wqkv_ref[E:E + 1, :]
    qkv = jnp.dot(x, w_qkv, preferred_element_type=jnp.float32) + b_qkv      # (R, 3E)
    q = qkv[:, :E]              # 1/sqrt(head_dim) already folded into the q weight/bias columns
    k = qkv[:, E:2 * E]
    v = qkv[:, 2 * E:]

    # --- block-diagonal attention: one (R, R) score matrix, cross-batch entries masked -------
    s = jnp.einsum('ld,md->lm', q, k, preferred_element_type=jnp.float32)    # (R, R)
    row_b = jax.lax.broadcasted_iota(jnp.int32, (R, R), 0) % batch
    col_b = jax.lax.broadcasted_iota(jnp.int32, (R, R), 1) % batch
    s = jnp.where(row_b == col_b, s, jnp.float32(-1e30))

    s = s - jnp.max(s, axis=-1, keepdims=True)
    p = jnp.exp(s)
    p = p / jnp.sum(p, axis=-1, keepdims=True)        # exact divide (matches torch softmax)

    attn = jnp.dot(p, v, preferred_element_type=jnp.float32)                 # (R, E)

    # --- fused (MHA out_proj o module out_proj) projection ------------------------------------
    w_out = wout_ref[:E, :]
    b_out = wout_ref[E:E + 1, :]
    y = jnp.dot(attn, w_out, preferred_element_type=jnp.float32) + b_out     # (R, embed_dim)
    o_ref[...] = y.astype(o_ref.dtype)


def init_params(key, embed_dim, attention_dim):
    E = attention_dim
    ks = jax.random.split(key, 6)
    scale = 1.0 / math.sqrt(E)
    return {
        "in_proj_weight":  jax.random.normal(ks[0], (3 * E, E), jnp.float32) * scale,
        "in_proj_bias":    jax.random.normal(ks[1], (3 * E,), jnp.float32) * scale,
        "mha_out_weight":  jax.random.normal(ks[2], (E, E), jnp.float32) * scale,
        "mha_out_bias":    jax.random.normal(ks[3], (E,), jnp.float32) * scale,
        "out_proj_weight": jax.random.normal(ks[4], (embed_dim, E), jnp.float32) * scale,
        "out_proj_bias":   jax.random.normal(ks[5], (embed_dim,), jnp.float32) * scale,
    }


def pack_params(params, embed_dim, attention_dim):
    """Host-side, one-time: fuse + pre-transpose + pre-scale the parameters into two slabs."""
    E = attention_dim
    num_heads = embed_dim
    head_dim = E // num_heads
    scale = 1.0 / math.sqrt(head_dim)

    # PyTorch Linear: y = x @ W.T + b.  in_proj_weight rows are [Wq; Wk; Wv].
    w_qkv = params["in_proj_weight"].T                     # (E, 3E), cols = [Wq.T | Wk.T | Wv.T]
    b_qkv = params["in_proj_bias"].reshape(1, 3 * E)
    col_scale = jnp.concatenate([jnp.full((E,), scale, jnp.float32),
                                 jnp.ones((2 * E,), jnp.float32)])
    slab_qkv = jnp.concatenate([w_qkv * col_scale, b_qkv * col_scale], axis=0)   # (E+1, 3E)

    # Exact linear fusion of MHA out_proj (E->E) and module out_proj (E->embed_dim).
    womT = params["mha_out_weight"].T                      # (E, E)
    bom = params["mha_out_bias"].reshape(1, E)
    woutT = params["out_proj_weight"].T                    # (E, embed_dim)
    bout = params["out_proj_bias"].reshape(1, embed_dim)
    w_total = womT @ woutT                                 # (E, embed_dim)
    b_total = bom @ woutT + bout                           # (1, embed_dim)
    slab_out = jnp.concatenate([w_total, b_total], axis=0)                       # (E+1, embed_dim)
    return slab_qkv, slab_out


def triplet_loss(anchor, positive, negative, margin=0.2):
    pos_dist = jnp.sum((anchor - positive) ** 2, axis=2)
    neg_dist = jnp.sum((anchor - negative) ** 2, axis=2)
    loss = jnp.maximum(neg_dist - pos_dist + margin, 0.0)
    return jnp.mean(loss)


def triplet_attention_forward(anchor, positive, negative, slab_qkv, slab_out, *, embed_dim):
    """anchor/positive/negative: (L, N, attention_dim), seq-first like nn.MultiheadAttention."""
    num_heads = embed_dim                      # nn.MultiheadAttention(attention_dim, embed_dim)
    assert num_heads == 1, "reference module only runs with embed_dim == 1"
    # TODO(synk): general multi-head (embed_dim > 1) path not implemented -- the reference
    # PyTorch forward raises a broadcast error in triplet_loss for embed_dim > 1.

    combined = jnp.concatenate([anchor, positive, negative], axis=1)   # (L, 3N, E)
    L, B, E = combined.shape
    x2 = combined.reshape(L * B, E)   # free reshape: row r = l*B + b, batch id = r % B

    vmem = pl.BlockSpec(memory_space=pltpu.MemorySpace.VMEM)
    y = pl.pallas_call(
        partial(_triplet_attn_kernel, batch=B),
        out_shape=jax.ShapeDtypeStruct((L * B, embed_dim), jnp.float32),
        in_specs=[vmem, vmem, vmem],
        out_specs=vmem,
    )(x2, slab_qkv, slab_out)

    attn_output = y.reshape(L, B, embed_dim)   # free reshape: already in (L, 3N, embed_dim) order
    # dropout: eval-mode identity.
    # TODO(synk): training-mode stochastic dropout mask is not reproduced (RNG-dependent).

    # Slicing exactly as in the PyTorch code (last dim is embed_dim, so the positive/negative
    # slices are width-0 and the loss constant-folds to the margin under jit).
    anchor_out = attn_output[:, :, :embed_dim]
    positive_out = attn_output[:, :, embed_dim:2 * embed_dim]
    negative_out = attn_output[:, :, 2 * embed_dim:]
    loss = triplet_loss(anchor_out, positive_out, negative_out)
    return attn_output, loss


def _reference_forward(anchor, positive, negative, params, *, embed_dim):
    """Plain-JAX single-head reference of the PyTorch forward (for validation only)."""
    combined = jnp.concatenate([anchor, positive, negative], axis=1)   # (L, B, E)
    L, B, E = combined.shape
    scale = 1.0 / math.sqrt(E // embed_dim)
    qkv = jnp.einsum('lbe,fe->lbf', combined, params["in_proj_weight"]) + params["in_proj_bias"]
    q = qkv[..., :E] * scale
    k = qkv[..., E:2 * E]
    v = qkv[..., 2 * E:]
    s = jnp.einsum('lbe,mbe->blm', q, k)
    p = jax.nn.softmax(s, axis=-1)
    attn = jnp.einsum('blm,mbe->lbe', p, v)
    attn = jnp.einsum('lbe,fe->lbf', attn, params["mha_out_weight"]) + params["mha_out_bias"]
    out = jnp.einsum('lbe,fe->lbf', attn, params["out_proj_weight"]) + params["out_proj_bias"]
    return out


if __name__ == "__main__":
    # embed_dim must be 1 for the reference PyTorch forward to run (see header note).
    embed_dim = 1          # == num_heads of the MultiheadAttention
    attention_dim = 32     # model dim of the MultiheadAttention
    L, N = 8, 2            # sequence length, per-input batch (combined batch = 3N = 6)

    key = jax.random.PRNGKey(0)
    k_a, k_p, k_n, k_w = jax.random.split(key, 4)
    anchor = jax.random.normal(k_a, (L, N, attention_dim), jnp.float32)
    positive = jax.random.normal(k_p, (L, N, attention_dim), jnp.float32)
    negative = jax.random.normal(k_n, (L, N, attention_dim), jnp.float32)
    params = init_params(k_w, embed_dim, attention_dim)

    # One-time host-side parameter packing (not part of the per-call op count).
    slab_qkv, slab_out = pack_params(params, embed_dim, attention_dim)

    fwd = jax.jit(partial(triplet_attention_forward, embed_dim=embed_dim))
    attn_out, loss = fwd(anchor, positive, negative, slab_qkv, slab_out)
    jax.block_until_ready((attn_out, loss))

    assert attn_out.shape == (L, 3 * N, embed_dim)
    assert loss.shape == ()

    # Validate against a plain-JAX reference of the PyTorch forward.
    ref = _reference_forward(anchor, positive, negative, params, embed_dim=embed_dim)
    max_err = float(jnp.max(jnp.abs(attn_out - ref)))
    assert max_err < 1e-3, f"max abs error vs reference: {max_err}"
    assert abs(float(loss) - 0.2) < 1e-6

    print("KERNEL_OK")
</pallas_src>

<mosaic_0001>
module attributes {stable_mosaic.version = 11 : i64} {
  func.func @_triplet_attn_kernel(%arg0: memref<48x32xf32, #tpu.memory_space<vmem>>, %arg1: memref<33x96xf32, #tpu.memory_space<vmem>>, %arg2: memref<33x1xf32, #tpu.memory_space<vmem>>, %arg3: memref<48x1xf32, #tpu.memory_space<vmem>>) attributes {dimension_semantics = [], scalar_prefetch = 0 : i64, scratch_operands = 0 : i64, tpu.core_type = #tpu.core_type<tc>} {
    %c0 = arith.constant 0 : index
    %c0_0 = arith.constant 0 : index
    %0 = vector.load %arg0[%c0, %c0_0] : memref<48x32xf32, #tpu.memory_space<vmem>>, vector<48x32xf32>
    %c0_1 = arith.constant 0 : index
    %c0_2 = arith.constant 0 : index
    %1 = vector.load %arg1[%c0_1, %c0_2] : memref<33x96xf32, #tpu.memory_space<vmem>>, vector<32x96xf32>
    %c32 = arith.constant 32 : index
    %c0_3 = arith.constant 0 : index
    %2 = vector.load %arg1[%c32, %c0_3] : memref<33x96xf32, #tpu.memory_space<vmem>>, vector<1x96xf32>
    %cst = arith.constant dense<0.000000e+00> : vector<48x96xf32>
    %3 = tpu.matmul %0, %1, %cst {dimension_numbers = #tpu.dot_dimension_numbers<[1], [0], [0], [1], [0, 0, 1, 1], [], []>} : vector<48x32xf32>, vector<32x96xf32>, vector<48x96xf32> -> vector<48x96xf32>
    %4 = vector.broadcast %2 : vector<1x96xf32> to vector<48x96xf32>
    %5 = arith.addf %3, %4 : vector<48x96xf32>
    %6 = vector.extract_strided_slice %5 {offsets = [0, 0], sizes = [48, 32], strides = [1, 1]} : vector<48x96xf32> to vector<48x32xf32>
    %7 = vector.extract_strided_slice %5 {offsets = [0, 32], sizes = [48, 32], strides = [1, 1]} : vector<48x96xf32> to vector<48x32xf32>
    %8 = vector.extract_strided_slice %5 {offsets = [0, 64], sizes = [48, 32], strides = [1, 1]} : vector<48x96xf32> to vector<48x32xf32>
    "tpu.trace_start"() <{level = 10 : i32, message = "ld,md->lm"}> : () -> ()
    %cst_4 = arith.constant dense<0.000000e+00> : vector<48x48xf32>
    %9 = tpu.matmul %6, %7, %cst_4 {dimension_numbers = #tpu.dot_dimension_numbers<[1], [1], [0], [0], [0, 0, 1, 0], [], []>} : vector<48x32xf32>, vector<48x32xf32>, vector<48x48xf32> -> vector<48x48xf32>
    "tpu.trace_stop"() : () -> ()
    %10 = tpu.iota {dimensions = array<i32: 0>} : vector<48x48xi32>
    %c6_i32 = arith.constant 6 : i32
    %c0_i32 = arith.constant 0 : i32
    %11 = arith.cmpi eq, %c6_i32, %c0_i32 : i32
    %c1_i32 = arith.constant 1 : i32
    %12 = arith.select %11, %c1_i32, %c6_i32 : i32
    %13 = vector.broadcast %12 : i32 to vector<48x48xi32>
    %14 = arith.remsi %10, %13 : vector<48x48xi32>
    %c0_i32_5 = arith.constant 0 : i32
    %15 = vector.broadcast %c0_i32_5 : i32 to vector<48x48xi32>
    %16 = arith.cmpi ne, %14, %15 : vector<48x48xi32>
    %c0_i32_6 = arith.constant 0 : i32
    %17 = vector.broadcast %c0_i32_6 : i32 to vector<48x48xi32>
    %18 = arith.cmpi slt, %14, %17 : vector<48x48xi32>
    %c0_i32_7 = arith.constant 0 : i32
    %19 = arith.cmpi slt, %12, %c0_i32_7 : i32
    %20 = vector.broadcast %19 : i1 to vector<48x48xi1>
    %21 = vector.broadcast %20 : vector<48x48xi1> to vector<48x48xi1>
    %22 = arith.xori %18, %21 : vector<48x48xi1>
    %23 = arith.andi %22, %16 : vector<48x48xi1>
    %24 = vector.broadcast %12 : i32 to vector<48x48xi32>
    %25 = arith.addi %14, %24 : vector<48x48xi32>
    %26 = arith.select %23, %25, %14 : vector<48x48xi1>, vector<48x48xi32>
    %27 = tpu.iota {dimensions = array<i32: 1>} : vector<48x48xi32>
    %c6_i32_8 = arith.constant 6 : i32
    %c0_i32_9 = arith.constant 0 : i32
    %28 = arith.cmpi eq, %c6_i32_8, %c0_i32_9 : i32
    %c1_i32_10 = arith.constant 1 : i32
    %29 = arith.select %28, %c1_i32_10, %c6_i32_8 : i32
    %30 = vector.broadcast %29 : i32 to vector<48x48xi32>
    %31 = arith.remsi %27, %30 : vector<48x48xi32>
    %c0_i32_11 = arith.constant 0 : i32
    %32 = vector.broadcast %c0_i32_11 : i32 to vector<48x48xi32>
    %33 = arith.cmpi ne, %31, %32 : vector<48x48xi32>
    %c0_i32_12 = arith.constant 0 : i32
    %34 = vector.broadcast %c0_i32_12 : i32 to vector<48x48xi32>
    %35 = arith.cmpi slt, %31, %34 : vector<48x48xi32>
    %c0_i32_13 = arith.constant 0 : i32
    %36 = arith.cmpi slt, %29, %c0_i32_13 : i32
    %37 = vector.broadcast %36 : i1 to vector<48x48xi1>
    %38 = vector.broadcast %37 : vector<48x48xi1> to vector<48x48xi1>
    %39 = arith.xori %35, %38 : vector<48x48xi1>
    %40 = arith.andi %39, %33 : vector<48x48xi1>
    %41 = vector.broadcast %29 : i32 to vector<48x48xi32>
    %42 = arith.addi %31, %41 : vector<48x48xi32>
    %43 = arith.select %40, %42, %31 : vector<48x48xi1>, vector<48x48xi32>
    %44 = arith.cmpi eq, %26, %43 : vector<48x48xi32>
    %cst_14 = arith.constant -1.000000e+30 : f32
    %45 = vector.broadcast %cst_14 : f32 to vector<48x48xf32>
    %46 = arith.select %44, %9, %45 : vector<48x48xi1>, vector<48x48xf32>
    %cst_15 = arith.constant dense<0xFF800000> : vector<48xf32>
    %47 = vector.multi_reduction <maximumf>, %46, %cst_15 [1] : vector<48x48xf32> to vector<48xf32>
    %48 = vector.shape_cast %47 : vector<48xf32> to vector<48x1xf32>
    %49 = vector.broadcast %48 : vector<48x1xf32> to vector<48x48xf32>
    %50 = arith.subf %46, %49 : vector<48x48xf32>
    %51 = math.exp %50 : vector<48x48xf32>
    %cst_16 = arith.constant dense<0.000000e+00> : vector<48xf32>
    %52 = vector.multi_reduction <add>, %51, %cst_16 [1] : vector<48x48xf32> to vector<48xf32>
    %53 = vector.shape_cast %52 : vector<48xf32> to vector<48x1xf32>
    %54 = vector.broadcast %53 : vector<48x1xf32> to vector<48x48xf32>
    %55 = arith.divf %51, %54 : vector<48x48xf32>
    %cst_17 = arith.constant dense<0.000000e+00> : vector<48x32xf32>
    %56 = tpu.matmul %55, %8, %cst_17 {dimension_numbers = #tpu.dot_dimension_numbers<[1], [0], [0], [1], [0, 0, 1, 1], [], []>} : vector<48x48xf32>, vector<48x32xf32>, vector<48x32xf32> -> vector<48x32xf32>
    %c0_18 = arith.constant 0 : index
    %c0_19 = arith.constant 0 : index
    %57 = vector.load %arg2[%c0_18, %c0_19] : memref<33x1xf32, #tpu.memory_space<vmem>>, vector<32x1xf32>
    %c32_20 = arith.constant 32 : index
    %c0_21 = arith.constant 0 : index
    %58 = vector.load %arg2[%c32_20, %c0_21] : memref<33x1xf32, #tpu.memory_space<vmem>>, vector<1x1xf32>
    %cst_22 = arith.constant dense<0.000000e+00> : vector<48x1xf32>
    %59 = tpu.matmul %56, %57, %cst_22 {dimension_numbers = #tpu.dot_dimension_numbers<[1], [0], [0], [1], [0, 0, 1, 1], [], []>} : vector<48x32xf32>, vector<32x1xf32>, vector<48x1xf32> -> vector<48x1xf32>
    %60 = vector.broadcast %58 : vector<1x1xf32> to vector<48x1xf32>
    %61 = arith.addf %59, %60 : vector<48x1xf32>
    %c0_23 = arith.constant 0 : index
    %c0_24 = arith.constant 0 : index
    %62 = vector.load %arg3[%c0_23, %c0_24] : memref<48x1xf32, #tpu.memory_space<vmem>>, vector<48x1xf32>
    tpu.vector_store %arg3[%c0_23, %c0_24], %61 {strides = array<i32>} : memref<48x1xf32, #tpu.memory_space<vmem>>, vector<48x1xf32>,
    return
  }
}

</mosaic_0001>

<llo_original>
// kernel: triplet_attention_forward.1
$region0: #{triplet_attention_forward.1}
  #allocation0 [shape = 'u32[]', space=smem, size = 0x4, offset = 0x4, fixed_abs, tag = 'smem constant byte address 0x4 - core index']
  #allocation1 [shape = 'u32[72,128]{1,0:T(1,128)}', space=vmem, size = 0x9000, scoped, tag = 'internal scratch']
  %s0 = inlined_call_operand.vmem [shape: f32[48,32], index: 0, kind: input, shape index: {}]
  %s1 = inlined_call_operand.vmem [shape: f32[33,96], index: 1, kind: input, shape index: {}]
  %s2 = inlined_call_operand.vmem [shape: f32[33,1], index: 2, kind: input, shape index: {}]
  %s3 = inlined_call_operand.vmem [shape: f32[48,1], index: 3, kind: output, shape index: {}]
  %s4 = sld [smem:[#allocation0]]
  $region22: #{triplet_attention_forward.1} parent=0
    _
  %s6 = ssub.s32 1, %s4
  %s7 = scalar_select 0, %s6, %s4
  // Predicated region
  $region2: #{triplet_attention_forward.1} parent=0 // pred_check
    _
  $region3: #{triplet_attention_forward.1} parent=0 // pred_check_branch
    %9 = sbr.rel (0) target = $region5
  $region4: #{triplet_attention_forward.1} parent=0 // pred_region
    _
  $region5: #{triplet_attention_forward.1} parent=0 // pred_fallthru
    _
  // Predicated region
  $region6: #{triplet_attention_forward.1} parent=0 // pred_check
    _
  $region7: #{triplet_attention_forward.1} parent=0 // pred_check_branch
    %11 = sbr.rel (0) target = $region9
  $region8: #{triplet_attention_forward.1} parent=0 // pred_region
    _
  $region9: #{triplet_attention_forward.1} parent=0 // pred_fallthru
    _
  // Predicated region
  $region10: #{triplet_attention_forward.1} parent=0 // pred_check
    _
  $region11: #{triplet_attention_forward.1} parent=0 // pred_check_branch
    %13 = sbr.rel (0) target = $region13
  $region12: #{triplet_attention_forward.1} parent=0 // pred_region
    _
  $region13: #{triplet_attention_forward.1} parent=0 // pred_fallthru
    _
  %v14 = vld [vmem:[%s0] sm:$0xff]
  %v15 = vld [vmem:[%s0 + $0x8] sm:$0xff]
  %v16 = vld [vmem:[%s0 + $0x10] sm:$0xff]
  %v17 = vld [vmem:[%s0 + $0x18] sm:$0xff]
  %v18 = vld [vmem:[%s0 + $0x20] sm:$0xff]
  %v19 = vld [vmem:[%s0 + $0x28] sm:$0xff]
  %v20 = vld [vmem:[%s1] sm:$0xff]
  %v21 = vld [vmem:[%s1 + $0x8] sm:$0xff]
  %v22 = vld [vmem:[%s1 + $0x10] sm:$0xff]
  %v23 = vld [vmem:[%s1 + $0x18] sm:$0xff]
  %v24 = vld [vmem:[%s1 + $0x20] sm:$0x1]
  %v25 = vperm.slane %v24, 0
  %vm26 = vcmask 261120
  %v28 = vsel %vm26, %v14, 0
  %v31 = vsel %vm26, %v15, 0
  %v34 = vsel %vm26, %v16, 0
  %v37 = vsel %vm26, %v17, 0
  %v40 = vsel %vm26, %v18, 0
  %v43 = vsel %vm26, %v19, 0
  %45 = vmatpush.msra.mxu0 0.0
  %46 = vmatpush.msra.mxu0 0.0
  %47 = vmatpush.msra.mxu0 0.0
  %48 = vmatpush.msra.mxu0 0.0
  %49 = vmatpush.msra.mxu0 0.0
  %50 = vmatpush.msra.mxu0 0.0
  %51 = vmatpush.msra.mxu0 0.0
  %52 = vmatpush.msra.mxu0 0.0
  %53 = vmatpush.msra.mxu0 0.0
  %54 = vmatpush.msra.mxu0 0.0
  %55 = vmatpush.msra.mxu0 0.0
  %56 = vmatpush.msra.mxu0 0.0
  %57 = vmatpush.msra.mxu0 %v23
  %58 = vmatpush.msra.mxu0 %v22
  %59 = vmatpush.msra.mxu0 %v21
  %60 = vmatpush.msra.mxu0 %v20
  %61 = vmatmul.f32.gmra.mxu0 %v28
  %v62 = vpop.f32.mrf.mxu0
  %v63 = vadd.f32 %v25, %v62
  %64 = vmatmul.f32.gmra.mxu0 %v31
  %v65 = vpop.f32.mrf.mxu0
  %v66 = vadd.f32 %v25, %v65
  %67 = vmatmul.f32.gmra.mxu0 %v34
  %v68 = vpop.f32.mrf.mxu0
  %v69 = vadd.f32 %v25, %v68
  %70 = vmatmul.f32.gmra.mxu0 %v37
  %v71 = vpop.f32.mrf.mxu0
  %v72 = vadd.f32 %v25, %v71
  %73 = vmatmul.f32.gmra.mxu0 %v40
  %v74 = vpop.f32.mrf.mxu0
  %v75 = vadd.f32 %v25, %v74
  %76 = vmatmul.f32.gmra.mxu0 %v43
  %v77 = vpop.f32.mrf.mxu0
  %v78 = vadd.f32 %v25, %v77
  %79 = vdwg.mxu0
  %86 = vrot.lane.b32.xlu0 %v63, 96
  %v87 = vpop.permute.xlu0 %86
  %88 = vrot.lane.b32.xlu0 %v66, 96
  %v89 = vpop.permute.xlu0 %88
  %90 = vrot.lane.b32.xlu0 %v69, 96
  %v91 = vpop.permute.xlu0 %90
  %92 = vrot.lane.b32.xlu0 %v72, 96
  %v93 = vpop.permute.xlu0 %92
  %94 = vrot.lane.b32.xlu0 %v75, 96
  %v95 = vpop.permute.xlu0 %94
  %96 = vrot.lane.b32.xlu0 %v78, 96
  %v97 = vpop.permute.xlu0 %96
  %v98 = vsel %vm26, %v63, 0
  %v100 = vsel %vm26, %v66, 0
  %v102 = vsel %vm26, %v69, 0
  %v104 = vsel %vm26, %v72, 0
  %v106 = vsel %vm26, %v75, 0
  %v108 = vsel %vm26, %v78, 0
  %v110 = vsel %vm26, %v87, 0
  %v112 = vsel %vm26, %v89, 0
  %v114 = vsel %vm26, %v91, 0
  %v116 = vsel %vm26, %v93, 0
  %v118 = vsel %vm26, %v95, 0
  %v120 = vsel %vm26, %v97, 0
  %122 = vmatpush.xpose.msra.mxu0 0.0
  %123 = vmatpush.xpose.msra.mxu0 0.0
  %124 = vmatpush.xpose.msra.mxu0 0.0
  %125 = vmatpush.xpose.msra.mxu0 0.0
  %126 = vmatpush.xpose.msra.mxu0 0.0
  %127 = vmatpush.xpose.msra.mxu0 0.0
  %128 = vmatpush.xpose.msra.mxu0 0.0
  %129 = vmatpush.xpose.msra.mxu0 0.0
  %130 = vmatpush.xpose.msra.mxu0 0.0
  %131 = vmatpush.xpose.msra.mxu0 0.0
  %132 = vmatpush.xpose.msra.mxu0 %v120
  %133 = vmatpush.xpose.msra.mxu0 %v118
  %134 = vmatpush.xpose.msra.mxu0 %v116
  %135 = vmatpush.xpose.msra.mxu0 %v114
  %136 = vmatpush.xpose.msra.mxu0 %v112
  %137 = vmatpush.xpose.msra.mxu0 %v110
  %138 = vmatmul.f32.gmra.mxu0 %v98
  %v139 = vpop.f32.mrf.mxu0
  %v140 = vadd.f32 0.0, %v139
  %141 = vmatmul.f32.gmra.mxu0 %v100
  %v142 = vpop.f32.mrf.mxu0
  %v143 = vadd.f32 0.0, %v142
  %144 = vmatmul.f32.gmra.mxu0 %v102
  %v145 = vpop.f32.mrf.mxu0
  %v146 = vadd.f32 0.0, %v145
  %147 = vmatmul.f32.gmra.mxu0 %v104
  %v148 = vpop.f32.mrf.mxu0
  %v149 = vadd.f32 0.0, %v148
  %150 = vmatmul.f32.gmra.mxu0 %v106
  %v151 = vpop.f32.mrf.mxu0
  %v152 = vadd.f32 0.0, %v151
  %153 = vmatmul.f32.gmra.mxu0 %v108
  %v154 = vpop.f32.mrf.mxu0
  %v155 = vadd.f32 0.0, %v154
  %156 = vdwg.mxu0
  %v157 = vlaneseq
  %v158 = vshrl.u32 %v157, 7
  %v159 = vadd.s32 %v158, 8
  %v160 = vadd.s32 %v158, 16
  %v161 = vadd.s32 %v158, 24
  %v162 = vadd.s32 %v158, 32
  %v163 = vadd.s32 %v158, 40
  %vm164 = vcmp.lt.s32.totalorder %v158, 0
  %v165 = vsub.s32 0, %v158
  %v166 = vsel %vm164, %v165, %v158
  %v167 = vand.u32 %v166, 65535
  %v168 = vshrl.u32 %v166, 16
  %v170 = vmul.u32 %v167, 43691
  %v171 = vmul.u32 %v167, 43690
  %v172 = vmul.u32 %v168, 43691
  %v173 = vmul.u32 %v168, 43690
  %v174 = vshll.u32 %v171, 16
  %v175 = vshrl.u32 %v171, 16
  %v176 = vshll.u32 %v172, 16
  %v177 = vshrl.u32 %v172, 16
  %vm178 = vc.u32 %v170, %v174
  %v179 = vsel %vm178, 1, 0
  %v180 = vadd.s32 %v170, %v174
  %v181 = vadd.s32 %v173, %v179
  %vm182 = vc.u32 %v180, %v176
  %v183 = vsel %vm182, 1, 0
  %v184 = vadd.s32 %v180, %v176
  %v185 = vadd.s32 %v181, %v183
  %v186 = vadd.s32 %v185, %v175
  %v187 = vadd.s32 %v186, %v177
  %v188 = vshrl.u32 %v187, 2
  %v189 = vmul.u32 %v188, 6
  %v190 = vsub.s32 %v166, %v189
  %v191 = vsub.s32 0, %v190
  %v192 = vsel %vm164, %v191, %v190
  %vm193 = vcmp.lt.s32.totalorder %v159, 0
  %v194 = vsub.s32 0, %v159
  %v195 = vsel %vm193, %v194, %v159
  %v196 = vand.u32 %v195, 65535
  %v197 = vshrl.u32 %v195, 16
  %v199 = vmul.u32 %v196, 43691
  %v200 = vmul.u32 %v196, 43690
  %v201 = vmul.u32 %v197, 43691
  %v202 = vmul.u32 %v197, 43690
  %v203 = vshll.u32 %v200, 16
  %v204 = vshrl.u32 %v200, 16
  %v205 = vshll.u32 %v201, 16
  %v206 = vshrl.u32 %v201, 16
  %vm207 = vc.u32 %v199, %v203
  %v208 = vsel %vm207, 1, 0
  %v209 = vadd.s32 %v199, %v203
  %v210 = vadd.s32 %v202, %v208
  %vm211 = vc.u32 %v209, %v205
  %v212 = vsel %vm211, 1, 0
  %v213 = vadd.s32 %v209, %v205
  %v214 = vadd.s32 %v210, %v212
  %v215 = vadd.s32 %v214, %v204
  %v216 = vadd.s32 %v215, %v206
  %v217 = vshrl.u32 %v216, 2
  %v218 = vmul.u32 %v217, 6
  %v219 = vsub.s32 %v195, %v218
  %v220 = vsub.s32 0, %v219
  %v221 = vsel %vm193, %v220, %v219
  %vm222 = vcmp.lt.s32.totalorder %v160, 0
  %v223 = vsub.s32 0, %v160
  %v224 = vsel %vm222, %v223, %v160
  %v225 = vand.u32 %v224, 65535
  %v226 = vshrl.u32 %v224, 16
  %v228 = vmul.u32 %v225, 43691
  %v229 = vmul.u32 %v225, 43690
  %v230 = vmul.u32 %v226, 43691
  %v231 = vmul.u32 %v226, 43690
  %v232 = vshll.u32 %v229, 16
  %v233 = vshrl.u32 %v229, 16
  %v234 = vshll.u32 %v230, 16
  %v235 = vshrl.u32 %v230, 16
  %vm236 = vc.u32 %v228, %v232
  %v237 = vsel %vm236, 1, 0
  %v238 = vadd.s32 %v228, %v232
  %v239 = vadd.s32 %v231, %v237
  %vm240 = vc.u32 %v238, %v234
  %v241 = vsel %vm240, 1, 0
  %v242 = vadd.s32 %v238, %v234
  %v243 = vadd.s32 %v239, %v241
  %v244 = vadd.s32 %v243, %v233
  %v245 = vadd.s32 %v244, %v235
  %v246 = vshrl.u32 %v245, 2
  %v247 = vmul.u32 %v246, 6
  %v248 = vsub.s32 %v224, %v247
  %v249 = vsub.s32 0, %v248
  %v250 = vsel %vm222, %v249, %v248
  %vm251 = vcmp.lt.s32.totalorder %v161, 0
  %v252 = vsub.s32 0, %v161
  %v253 = vsel %vm251, %v252, %v161
  %v254 = vand.u32 %v253, 65535
  %v255 = vshrl.u32 %v253, 16
  %v257 = vmul.u32 %v254, 43691
  %v258 = vmul.u32 %v254, 43690
  %v259 = vmul.u32 %v255, 43691
  %v260 = vmul.u32 %v255, 43690
  %v261 = vshll.u32 %v258, 16
  %v262 = vshrl.u32 %v258, 16
  %v263 = vshll.u32 %v259, 16
  %v264 = vshrl.u32 %v259, 16
  %vm265 = vc.u32 %v257, %v261
  %v266 = vsel %vm265, 1, 0
  %v267 = vadd.s32 %v257, %v261
  %v268 = vadd.s32 %v260, %v266
  %vm269 = vc.u32 %v267, %v263
  %v270 = vsel %vm269, 1, 0
  %v271 = vadd.s32 %v267, %v263
  %v272 = vadd.s32 %v268, %v270
  %v273 = vadd.s32 %v272, %v262
  %v274 = vadd.s32 %v273, %v264
  %v275 = vshrl.u32 %v274, 2
  %v276 = vmul.u32 %v275, 6
  %v277 = vsub.s32 %v253, %v276
  %v278 = vsub.s32 0, %v277
  %v279 = vsel %vm251, %v278, %v277
  %vm280 = vcmp.lt.s32.totalorder %v162, 0
  %v281 = vsub.s32 0, %v162
  %v282 = vsel %vm280, %v281, %v162
  %v283 = vand.u32 %v282, 65535
  %v284 = vshrl.u32 %v282, 16
  %v286 = vmul.u32 %v283, 43691
  %v287 = vmul.u32 %v283, 43690
  %v288 = vmul.u32 %v284, 43691
  %v289 = vmul.u32 %v284, 43690
  %v290 = vshll.u32 %v287, 16
  %v291 = vshrl.u32 %v287, 16
  %v292 = vshll.u32 %v288, 16
  %v293 = vshrl.u32 %v288, 16
  %vm294 = vc.u32 %v286, %v290
  %v295 = vsel %vm294, 1, 0
  %v296 = vadd.s32 %v286, %v290
  %v297 = vadd.s32 %v289, %v295
  %vm298 = vc.u32 %v296, %v292
  %v299 = vsel %vm298, 1, 0
  %v300 = vadd.s32 %v296, %v292
  %v301 = vadd.s32 %v297, %v299
  %v302 = vadd.s32 %v301, %v291
  %v303 = vadd.s32 %v302, %v293
  %v304 = vshrl.u32 %v303, 2
  %v305 = vmul.u32 %v304, 6
  %v306 = vsub.s32 %v282, %v305
  %v307 = vsub.s32 0, %v306
  %v308 = vsel %vm280, %v307, %v306
  %vm309 = vcmp.lt.s32.totalorder %v163, 0
  %v310 = vsub.s32 0, %v163
  %v311 = vsel %vm309, %v310, %v163
  %v312 = vand.u32 %v311, 65535
  %v313 = vshrl.u32 %v311, 16
  %v315 = vmul.u32 %v312, 43691
  %v316 = vmul.u32 %v312, 43690
  %v317 = vmul.u32 %v313, 43691
  %v318 = vmul.u32 %v313, 43690
  %v319 = vshll.u32 %v316, 16
  %v320 = vshrl.u32 %v316, 16
  %v321 = vshll.u32 %v317, 16
  %v322 = vshrl.u32 %v317, 16
  %vm323 = vc.u32 %v315, %v319
  %v324 = vsel %vm323, 1, 0
  %v325 = vadd.s32 %v315, %v319
  %v326 = vadd.s32 %v318, %v324
  %vm327 = vc.u32 %v325, %v321
  %v328 = vsel %vm327, 1, 0
  %v329 = vadd.s32 %v325, %v321
  %v330 = vadd.s32 %v326, %v328
  %v331 = vadd.s32 %v330, %v320
  %v332 = vadd.s32 %v331, %v322
  %v333 = vshrl.u32 %v332, 2
  %v334 = vmul.u32 %v333, 6
  %v335 = vsub.s32 %v311, %v334
  %v336 = vsub.s32 0, %v335
  %v337 = vsel %vm309, %v336, %v335
  %vm338 = vcmp.ne.s32.totalorder %v192, 0
  %vm339 = vcmp.ne.s32.totalorder %v221, 0
  %vm340 = vcmp.ne.s32.totalorder %v250, 0
  %vm341 = vcmp.ne.s32.totalorder %v279, 0
  %vm342 = vcmp.ne.s32.totalorder %v308, 0
  %vm343 = vcmp.ne.s32.totalorder %v337, 0
  %vm344 = vcmp.lt.s32.totalorder %v192, 0
  %vm345 = vcmp.lt.s32.totalorder %v221, 0
  %vm346 = vcmp.lt.s32.totalorder %v250, 0
  %vm347 = vcmp.lt.s32.totalorder %v279, 0
  %vm348 = vcmp.lt.s32.totalorder %v308, 0
  %vm349 = vcmp.lt.s32.totalorder %v337, 0
  %vm350 = vmand %vm344, %vm338
  %vm351 = vmand %vm345, %vm339
  %vm352 = vmand %vm346, %vm340
  %vm353 = vmand %vm347, %vm341
  %vm354 = vmand %vm348, %vm342
  %vm355 = vmand %vm349, %vm343
  %v356 = vadd.s32 %v192, 6
  %v357 = vadd.s32 %v221, 6
  %v358 = vadd.s32 %v250, 6
  %v359 = vadd.s32 %v279, 6
  %v360 = vadd.s32 %v308, 6
  %v361 = vadd.s32 %v337, 6
  %v362 = vsel %vm350, %v356, %v192
  %v363 = vsel %vm351, %v357, %v221
  %v364 = vsel %vm352, %v358, %v250
  %v365 = vsel %vm353, %v359, %v279
  %v366 = vsel %vm354, %v360, %v308
  %v367 = vsel %vm355, %v361, %v337
  %v368 = vlaneseq
  %v369 = vand.u32 %v368, 127
  %vm370 = vcmp.lt.s32.totalorder %v369, 0
  %v371 = vsub.s32 0, %v369
  %v372 = vsel %vm370, %v371, %v369
  %v373 = vand.u32 %v372, 65535
  %v374 = vshrl.u32 %v372, 16
  %v376 = vmul.u32 %v373, 43691
  %v377 = vmul.u32 %v373, 43690
  %v378 = vmul.u32 %v374, 43691
  %v379 = vmul.u32 %v374, 43690
  %v380 = vshll.u32 %v377, 16
  %v381 = vshrl.u32 %v377, 16
  %v382 = vshll.u32 %v378, 16
  %v383 = vshrl.u32 %v378, 16
  %vm384 = vc.u32 %v376, %v380
  %v385 = vsel %vm384, 1, 0
  %v386 = vadd.s32 %v376, %v380
  %v387 = vadd.s32 %v379, %v385
  %vm388 = vc.u32 %v386, %v382
  %v389 = vsel %vm388, 1, 0
  %v390 = vadd.s32 %v386, %v382
  %v391 = vadd.s32 %v387, %v389
  %v392 = vadd.s32 %v391, %v381
  %v393 = vadd.s32 %v392, %v383
  %v394 = vshrl.u32 %v393, 2
  %v395 = vmul.u32 %v394, 6
  %v396 = vsub.s32 %v372, %v395
  %v397 = vsub.s32 0, %v396
  %v398 = vsel %vm370, %v397, %v396
  %vm399 = vcmp.ne.s32.totalorder %v398, 0
  %vm400 = vcmp.lt.s32.totalorder %v398, 0
  %vm401 = vmand %vm400, %vm399
  %v402 = vadd.s32 %v398, 6
  %v403 = vsel %vm401, %v402, %v398
  %vm404 = vcmp.eq.s32.totalorder %v362, %v403
  %vm405 = vcmp.eq.s32.totalorder %v363, %v403
  %vm406 = vcmp.eq.s32.totalorder %v364, %v403
  %vm407 = vcmp.eq.s32.totalorder %v365, %v403
  %vm408 = vcmp.eq.s32.totalorder %v366, %v403
  %vm409 = vcmp.eq.s32.totalorder %v367, %v403
  %v410 = vsel %vm404, %v140, -1e+30
  %v411 = vsel %vm405, %v143, -1e+30
  %v412 = vsel %vm406, %v146, -1e+30
  %v413 = vsel %vm407, %v149, -1e+30
  %v414 = vsel %vm408, %v152, -1e+30
  %v415 = vsel %vm409, %v155, -1e+30
  %vm416 = vcmask 392192
  %v417 = vsel %vm416, %v410, -inf
  %418 = vmax.xlane.f32.xlu0 %v417
  %v419 = vpop.xlane.xlu0 %418
  %v420 = vsel %vm416, %v411, -inf
  %421 = vmax.xlane.f32.xlu0 %v420
  %v422 = vpop.xlane.xlu0 %421
  %v423 = vsel %vm416, %v412, -inf
  %424 = vmax.xlane.f32.xlu0 %v423
  %v425 = vpop.xlane.xlu0 %424
  %v426 = vsel %vm416, %v413, -inf
  %427 = vmax.xlane.f32.xlu0 %v426
  %v428 = vpop.xlane.xlu0 %427
  %v429 = vsel %vm416, %v414, -inf
  %430 = vmax.xlane.f32.xlu0 %v429
  %v431 = vpop.xlane.xlu0 %430
  %v432 = vsel %vm416, %v415, -inf
  %433 = vmax.xlane.f32.xlu0 %v432
  %v434 = vpop.xlane.xlu0 %433
  %v435 = vsub.f32 %v410, %v419
  %v436 = vsub.f32 %v411, %v422
  %v437 = vsub.f32 %v412, %v425
  %v438 = vsub.f32 %v413, %v428
  %v439 = vsub.f32 %v414, %v431
  %v440 = vsub.f32 %v415, %v434
  %v441 = vmul.f32 %v435, 1.442695
  %v442 = vpow.pop %v441
  %v443 = vmul.f32 %v436, 1.442695
  %v444 = vpow.pop %v443
  %v445 = vmul.f32 %v437, 1.442695
  %v446 = vpow.pop %v445
  %v447 = vmul.f32 %v438, 1.442695
  %v448 = vpow.pop %v447
  %v449 = vmul.f32 %v439, 1.442695
  %v450 = vpow.pop %v449
  %v451 = vmul.f32 %v440, 1.442695
  %v452 = vpow.pop %v451
  %v453 = vsel %vm416, %v442, 0.0
  %454 = vadd.xlane.f32.xlu0 %v453
  %v455 = vpop.xlane.xlu0 %454
  %v456 = vsel %vm416, %v444, 0.0
  %457 = vadd.xlane.f32.xlu0 %v456
  %v458 = vpop.xlane.xlu0 %457
  %v459 = vsel %vm416, %v446, 0.0
  %460 = vadd.xlane.f32.xlu0 %v459
  %v461 = vpop.xlane.xlu0 %460
  %v462 = vsel %vm416, %v448, 0.0
  %463 = vadd.xlane.f32.xlu0 %v462
  %v464 = vpop.xlane.xlu0 %463
  %v465 = vsel %vm416, %v450, 0.0
  %466 = vadd.xlane.f32.xlu0 %v465
  %v467 = vpop.xlane.xlu0 %466
  %v468 = vsel %vm416, %v452, 0.0
  %469 = vadd.xlane.f32.xlu0 %v468
  %v470 = vpop.xlane.xlu0 %469
  %v471 = vrcp.pop %v455
  %v472 = vmul.f32 %v455, %v471
  %v473 = vsub.f32 1.0, %v472
  %v474 = vmul.f32 %v471, %v473
  %v475 = vadd.f32 %v471, %v474
  %vm476 = vweird.f32 %v455
  %vm477 = vweird.f32 %v471
  %vm478 = vmor %vm476, %vm477
  %v479 = vsel %vm478, %v471, %v475
  %v480 = vand.u32 2147483647, %v455
  %vm481 = vcmp.eq.f32.partialorder %v480, 8.507059e+37
  %v482 = vand.u32 %v455, 2147483648
  %v483 = vor.u32 1.1754944e-38, %v482
  %v484 = vsel %vm481, %v483, %v479
  %v485 = vmul.f32 %v442, %v484
  %v486 = vrcp.pop %v458
  %v487 = vmul.f32 %v458, %v486
  %v488 = vsub.f32 1.0, %v487
  %v489 = vmul.f32 %v486, %v488
  %v490 = vadd.f32 %v486, %v489
  %vm491 = vweird.f32 %v458
  %vm492 = vweird.f32 %v486
  %vm493 = vmor %vm491, %vm492
  %v494 = vsel %vm493, %v486, %v490
  %v495 = vand.u32 2147483647, %v458
  %vm496 = vcmp.eq.f32.partialorder %v495, 8.507059e+37
  %v497 = vand.u32 %v458, 2147483648
  %v498 = vor.u32 1.1754944e-38, %v497
  %v499 = vsel %vm496, %v498, %v494
  %v500 = vmul.f32 %v444, %v499
  %v501 = vrcp.pop %v461
  %v502 = vmul.f32 %v461, %v501
  %v503 = vsub.f32 1.0, %v502
  %v504 = vmul.f32 %v501, %v503
  %v505 = vadd.f32 %v501, %v504
  %vm506 = vweird.f32 %v461
  %vm507 = vweird.f32 %v501
  %vm508 = vmor %vm506, %vm507
  %v509 = vsel %vm508, %v501, %v505
  %v510 = vand.u32 2147483647, %v461
  %vm511 = vcmp.eq.f32.partialorder %v510, 8.507059e+37
  %v512 = vand.u32 %v461, 2147483648
  %v513 = vor.u32 1.1754944e-38, %v512
  %v514 = vsel %vm511, %v513, %v509
  %v515 = vmul.f32 %v446, %v514
  %v516 = vrcp.pop %v464
  %v517 = vmul.f32 %v464, %v516
  %v518 = vsub.f32 1.0, %v517
  %v519 = vmul.f32 %v516, %v518
  %v520 = vadd.f32 %v516, %v519
  %vm521 = vweird.f32 %v464
  %vm522 = vweird.f32 %v516
  %vm523 = vmor %vm521, %vm522
  %v524 = vsel %vm523, %v516, %v520
  %v525 = vand.u32 2147483647, %v464
  %vm526 = vcmp.eq.f32.partialorder %v525, 8.507059e+37
  %v527 = vand.u32 %v464, 2147483648
  %v528 = vor.u32 1.1754944e-38, %v527
  %v529 = vsel %vm526, %v528, %v524
  %v530 = vmul.f32 %v448, %v529
  %v531 = vrcp.pop %v467
  %v532 = vmul.f32 %v467, %v531
  %v533 = vsub.f32 1.0, %v532
  %v534 = vmul.f32 %v531, %v533
  %v535 = vadd.f32 %v531, %v534
  %vm536 = vweird.f32 %v467
  %vm537 = vweird.f32 %v531
  %vm538 = vmor %vm536, %vm537
  %v539 = vsel %vm538, %v531, %v535
  %v540 = vand.u32 2147483647, %v467
  %vm541 = vcmp.eq.f32.partialorder %v540, 8.507059e+37
  %v542 = vand.u32 %v467, 2147483648
  %v543 = vor.u32 1.1754944e-38, %v542
  %v544 = vsel %vm541, %v543, %v539
  %v545 = vmul.f32 %v450, %v544
  %v546 = vrcp.pop %v470
  %v547 = vmul.f32 %v470, %v546
  %v548 = vsub.f32 1.0, %v547
  %v549 = vmul.f32 %v546, %v548
  %v550 = vadd.f32 %v546, %v549
  %vm551 = vweird.f32 %v470
  %vm552 = vweird.f32 %v546
  %vm553 = vmor %vm551, %vm552
  %v554 = vsel %vm553, %v546, %v550
  %v555 = vand.u32 2147483647, %v470
  %vm556 = vcmp.eq.f32.partialorder %v555, 8.507059e+37
  %v557 = vand.u32 %v470, 2147483648
  %v558 = vor.u32 1.1754944e-38, %v557
  %v559 = vsel %vm556, %v558, %v554
  %v560 = vmul.f32 %v452, %v559
  %561 = vrot.lane.b32.xlu0 %v63, 64
  %v562 = vpop.permute.xlu0 %561
  %563 = vrot.lane.b32.xlu0 %v66, 64
  %v564 = vpop.permute.xlu0 %563
  %565 = vrot.lane.b32.xlu0 %v69, 64
  %v566 = vpop.permute.xlu0 %565
  %567 = vrot.lane.b32.xlu0 %v72, 64
  %v568 = vpop.permute.xlu0 %567
  %569 = vrot.lane.b32.xlu0 %v75, 64
  %v570 = vpop.permute.xlu0 %569
  %571 = vrot.lane.b32.xlu0 %v78, 64
  %v572 = vpop.permute.xlu0 %571
  %v580 = vsel %vm416, %v485, 0
  %v583 = vsel %vm416, %v500, 0
  %v586 = vsel %vm416, %v515, 0
  %v589 = vsel %vm416, %v530, 0
  %v592 = vsel %vm416, %v545, 0
  %v595 = vsel %vm416, %v560, 0
  %597 = vmatpush.msra.mxu0 0.0
  %598 = vmatpush.msra.mxu0 0.0
  %599 = vmatpush.msra.mxu0 0.0
  %600 = vmatpush.msra.mxu0 0.0
  %601 = vmatpush.msra.mxu0 0.0
  %602 = vmatpush.msra.mxu0 0.0
  %603 = vmatpush.msra.mxu0 0.0
  %604 = vmatpush.msra.mxu0 0.0
  %605 = vmatpush.msra.mxu0 0.0
  %606 = vmatpush.msra.mxu0 0.0
  %607 = vmatpush.msra.mxu0 %v572
  %608 = vmatpush.msra.mxu0 %v570
  %609 = vmatpush.msra.mxu0 %v568
  %610 = vmatpush.msra.mxu0 %v566
  %611 = vmatpush.msra.mxu0 %v564
  %612 = vmatpush.msra.mxu0 %v562
  %613 = vmatmul.f32.gmra.mxu0 %v580
  %v614 = vpop.f32.mrf.mxu0
  %v615 = vadd.f32 0.0, %v614
  %616 = vmatmul.f32.gmra.mxu0 %v583
  %v617 = vpop.f32.mrf.mxu0
  %v618 = vadd.f32 0.0, %v617
  %619 = vmatmul.f32.gmra.mxu0 %v586
  %v620 = vpop.f32.mrf.mxu0
  %v621 = vadd.f32 0.0, %v620
  %622 = vmatmul.f32.gmra.mxu0 %v589
  %v623 = vpop.f32.mrf.mxu0
  %v624 = vadd.f32 0.0, %v623
  %625 = vmatmul.f32.gmra.mxu0 %v592
  %v626 = vpop.f32.mrf.mxu0
  %v627 = vadd.f32 0.0, %v626
  %628 = vmatmul.f32.gmra.mxu0 %v595
  %v629 = vpop.f32.mrf.mxu0
  %v630 = vadd.f32 0.0, %v629
  %631 = vdwg.mxu0
  %v632 = vld [vmem:[%s2] sm:$0xff]
  %v633 = vld [vmem:[%s2 + $0x8] sm:$0xff]
  %v634 = vld [vmem:[%s2 + $0x10] sm:$0xff]
  %v635 = vld [vmem:[%s2 + $0x18] sm:$0xff]
  %v636 = vld [vmem:[%s2 + $0x20] sm:$0x1]
  %v637 = vperm.slane %v636, 0
  %v639 = vsel %vm26, %v615, 0
  %v642 = vsel %vm26, %v618, 0
  %v645 = vsel %vm26, %v621, 0
  %v648 = vsel %vm26, %v624, 0
  %v651 = vsel %vm26, %v627, 0
  %v654 = vsel %vm26, %v630, 0
  %656 = vmatpush.msra.mxu0 0.0
  %657 = vmatpush.msra.mxu0 0.0
  %658 = vmatpush.msra.mxu0 0.0
  %659 = vmatpush.msra.mxu0 0.0
  %660 = vmatpush.msra.mxu0 0.0
  %661 = vmatpush.msra.mxu0 0.0
  %662 = vmatpush.msra.mxu0 0.0
  %663 = vmatpush.msra.mxu0 0.0
  %664 = vmatpush.msra.mxu0 0.0
  %665 = vmatpush.msra.mxu0 0.0
  %666 = vmatpush.msra.mxu0 0.0
  %667 = vmatpush.msra.mxu0 0.0
  %668 = vmatpush.msra.mxu0 %v635
  %669 = vmatpush.msra.mxu0 %v634
  %670 = vmatpush.msra.mxu0 %v633
  %671 = vmatpush.msra.mxu0 %v632
  %672 = vmatmul.f32.gmra.mxu0 %v639
  %v673 = vpop.f32.mrf.mxu0
  %v674 = vadd.f32 %v637, %v673
  %675 = vmatmul.f32.gmra.mxu0 %v642
  %v676 = vpop.f32.mrf.mxu0
  %v677 = vadd.f32 %v637, %v676
  %678 = vmatmul.f32.gmra.mxu0 %v645
  %v679 = vpop.f32.mrf.mxu0
  %v680 = vadd.f32 %v637, %v679
  %681 = vmatmul.f32.gmra.mxu0 %v648
  %v682 = vpop.f32.mrf.mxu0
  %v683 = vadd.f32 %v637, %v682
  %684 = vmatmul.f32.gmra.mxu0 %v651
  %v685 = vpop.f32.mrf.mxu0
  %v686 = vadd.f32 %v637, %v685
  %687 = vmatmul.f32.gmra.mxu0 %v654
  %v688 = vpop.f32.mrf.mxu0
  %v689 = vadd.f32 %v637, %v688
  %690 = vdwg.mxu0
  %vm691 = vcmask 7168
  %692 = vst.msk [vmem:[%s3] sm:$0xff] %vm691, %v674
  %693 = vst.msk [vmem:[%s3 + $0x8] sm:$0xff] %vm691, %v677
  %694 = vst.msk [vmem:[%s3 + $0x10] sm:$0xff] %vm691, %v680
  %695 = vst.msk [vmem:[%s3 + $0x18] sm:$0xff] %vm691, %v683
  %696 = vst.msk [vmem:[%s3 + $0x20] sm:$0xff] %vm691, %v686
  %697 = vst.msk [vmem:[%s3 + $0x28] sm:$0xff] %vm691, %v689
  // Predicated region
  $region14: #{triplet_attention_forward.1} parent=0 // pred_check
    _
  $region15: #{triplet_attention_forward.1} parent=0 // pred_check_branch
    %699 = sbr.rel (0) target = $region17
  $region16: #{triplet_attention_forward.1} parent=0 // pred_region
    _
  $region17: #{triplet_attention_forward.1} parent=0 // pred_fallthru
    _
  // Predicated region
  $region18: #{triplet_attention_forward.1} parent=0 // pred_check
    _
  $region19: #{triplet_attention_forward.1} parent=0 // pred_check_branch
    %701 = sbr.rel (0) target = $region21
  $region20: #{triplet_attention_forward.1} parent=0 // pred_region
    _
  $region21: #{triplet_attention_forward.1} parent=0 // pred_fallthru
    _

</llo_original>
